<compile_context>
chip_gen: v7x
topology: tpu7x:2x2x1
jax: 0.10.0
libtpu: 0.0.40
codegen_flags: <defaults>
</compile_context>

<pallas_src>
import functools

import jax
import jax.numpy as jnp
from jax.experimental import pallas as pl
from jax.experimental.pallas import tpu as pltpu

_LANE = 128
_SUBLANE = 8
# Per-block VMEM budget for the streamed input (Pallas double-buffers it).
_X_BLOCK_BYTES = 4 * 1024 * 1024
_VMEM_LIMIT_BYTES = 32 * 1024 * 1024


def _dsvdd_kernel(x_ref, c_ref, r2_ref, out_ref, dist_acc, *,
                  soft_boundary, batch, tile_b, mask_rows):
    i = pl.program_id(0)            # batch-block index ("parallel")
    j = pl.program_id(1)            # feature-block index ("arbitrary" reduction)
    nd = pl.num_programs(1)

    @pl.when(j == 0)
    def _():
        dist_acc[...] = jnp.zeros_like(dist_acc)

    # Cast per tile (inputs stream in native dtype; accumulate in f32).
    x = x_ref[...].astype(jnp.float32)                  # (tile_b, tile_d)
    c = c_ref[...].astype(jnp.float32)                  # (1, tile_d)
    diff = c - x
    dist_acc[...] += jnp.sum(diff * diff, axis=1, keepdims=True)   # (tile_b, 1)

    @pl.when(j == nd - 1)
    def _():
        dist = dist_acc[...]                            # full per-row distances
        if soft_boundary:
            val = jnp.maximum(dist - r2_ref[0], 0.0)    # hinge after full dist
        else:
            val = dist
        if mask_rows:
            # Mask rows outside the true batch (boundary-block padding only).
            row = i * tile_b + jax.lax.broadcasted_iota(
                jnp.int32, (tile_b, 1), 0)
            val = jnp.where(row < batch, val, 0.0)
        partial = jnp.sum(val)                          # block partial sum
        out_ref[...] = jnp.full(out_ref.shape, partial, jnp.float32)


def _pick_tile_d(D, itemsize):
    # Keep the whole feature dim in one block when it fits (block == full
    # array dim is always a legal block shape); otherwise use a lane-aligned
    # divisor so the reduction axis can be tiled without padding.
    if D * _SUBLANE * itemsize <= _X_BLOCK_BYTES or D % _LANE != 0:
        # NOTE: a very large D that is not a multiple of 128 would need
        # wrapper-side zero padding; typical DeepSVDD embedding dims are fine.
        return D
    td = min(D, 4096)
    td -= td % _LANE
    while D % td != 0:
        td -= _LANE
    return max(td, _LANE)


def _pick_tile_b(B, tile_d, itemsize):
    sub = _SUBLANE * max(1, 4 // itemsize)      # sublane packing granularity
    tb = _X_BLOCK_BYTES // max(1, tile_d * itemsize)
    tb = max(sub, (tb // sub) * sub)
    b_padded = ((B + sub - 1) // sub) * sub
    return min(tb, b_padded)


def deep_svdd_loss(x, c, R, nu, eps=1e-6, soft_boundary=False,
                   tile_b=None, tile_d=None):
    """Pallas implementation of DeepSVDDLoss.forward(input=x, R=R)."""
    del eps  # unused in the PyTorch forward pass as well
    B, D = x.shape
    c2 = jnp.reshape(c, (1, D))                 # native dtype, cast in kernel
    r2_val = jnp.asarray(R, jnp.float32) ** 2
    r2 = jnp.reshape(r2_val, (1,))

    itemsize = jnp.dtype(x.dtype).itemsize
    if tile_d is None:
        tile_d = _pick_tile_d(D, itemsize)
    if tile_b is None:
        tile_b = _pick_tile_b(B, tile_d, itemsize)
    nb = pl.cdiv(B, tile_b)
    nd = pl.cdiv(D, tile_d)
    mask_rows = (nb * tile_b) != B              # static: compile out if even

    kernel = functools.partial(
        _dsvdd_kernel,
        soft_boundary=bool(soft_boundary),
        batch=B,
        tile_b=tile_b,
        mask_rows=mask_rows,
    )

    partials = pl.pallas_call(
        kernel,
        out_shape=jax.ShapeDtypeStruct((nb, _SUBLANE, _LANE), jnp.float32),
        grid_spec=pltpu.PrefetchScalarGridSpec(
            num_scalar_prefetch=0,
            grid=(nb, nd),
            in_specs=[
                pl.BlockSpec((tile_b, tile_d), lambda i, j: (i, j)),
                pl.BlockSpec((1, tile_d), lambda i, j: (0, j)),
                pl.BlockSpec(memory_space=pltpu.SMEM),          # R^2 scalar
            ],
            out_specs=pl.BlockSpec((1, _SUBLANE, _LANE), lambda i, j: (i, 0, 0)),
            scratch_shapes=[pltpu.VMEM((tile_b, 1), jnp.float32)],
        ),
        compiler_params=pltpu.CompilerParams(
            dimension_semantics=("parallel", "arbitrary"),
            vmem_limit_bytes=_VMEM_LIMIT_BYTES),
        cost_estimate=pl.CostEstimate(
            flops=3 * B * D,
            transcendentals=0,
            bytes_accessed=B * D * itemsize + D * itemsize
                           + nb * _SUBLANE * _LANE * 4),
    )(x, c2, r2)

    total = jnp.sum(partials[:, 0, 0])
    mean = total / jnp.float32(B)
    if soft_boundary:
        return r2_val + (1.0 / float(nu)) * mean
    return mean


def _reference(x, c, R, nu, soft_boundary):
    xf = x.astype(jnp.float32)
    cf = c.astype(jnp.float32)
    dist = jnp.sum((cf[None, :] - xf) ** 2, axis=1)
    if soft_boundary:
        scores = dist - R ** 2
        return R ** 2 + (1.0 / nu) * jnp.mean(jnp.maximum(scores, 0.0))
    return jnp.mean(dist)


if __name__ == "__main__":
    key = jax.random.PRNGKey(0)
    kx, kc, kx2, kc2 = jax.random.split(key, 4)
    R, nu = 0.5, 0.1

    # Case 1: small shapes, single block (hard + soft boundary).
    B, D = 8, 32
    x = jax.random.normal(kx, (B, D), dtype=jnp.float32)
    c = jax.random.normal(kc, (D,), dtype=jnp.float32)

    got = deep_svdd_loss(x, c, R, nu, soft_boundary=False)
    jax.block_until_ready(got)
    want = _reference(x, c, R, nu, False)
    assert jnp.allclose(got, want, rtol=1e-5, atol=1e-5), (got, want)

    got = deep_svdd_loss(x, c, R, nu, soft_boundary=True)
    jax.block_until_ready(got)
    want = _reference(x, c, R, nu, True)
    assert jnp.allclose(got, want, rtol=1e-5, atol=1e-5), (got, want)

    # Case 2: tiled batch + tiled feature (reduction) axis, ragged batch
    # (exercises the boundary-row masking path).
    B2, D2 = 20, 256
    x2 = jax.random.normal(kx2, (B2, D2), dtype=jnp.float32)
    c2 = jax.random.normal(kc2, (D2,), dtype=jnp.float32)
    got = deep_svdd_loss(x2, c2, R, nu, soft_boundary=True, tile_b=8, tile_d=128)
    jax.block_until_ready(got)
    want = _reference(x2, c2, R, nu, True)
    assert jnp.allclose(got, want, rtol=1e-5, atol=1e-5), (got, want)

    # Case 3: native bf16 streaming with in-kernel f32 accumulation.
    x2b = x2.astype(jnp.bfloat16)
    c2b = c2.astype(jnp.bfloat16)
    got = deep_svdd_loss(x2b, c2b, R, nu, soft_boundary=False,
                         tile_b=16, tile_d=128)
    jax.block_until_ready(got)
    want = _reference(x2b, c2b, R, nu, False)
    assert jnp.allclose(got, want, rtol=1e-4, atol=1e-4), (got, want)

    print("KERNEL_OK")
</pallas_src>

<mosaic_0001>
module attributes {stable_mosaic.version = 11 : i64} {
  func.func @_dsvdd_kernel(%arg0: i32, %arg1: i32, %arg2: memref<8x32xf32, #tpu.memory_space<vmem>>, %arg3: memref<1x32xf32, #tpu.memory_space<vmem>>, %arg4: memref<1xf32, #tpu.memory_space<smem>>, %arg5: memref<1x8x128xf32, #tpu.memory_space<vmem>>, %arg6: memref<8x1xf32, #tpu.memory_space<vmem>>) attributes {dimension_semantics = [#tpu.dimension_semantics<parallel>, #tpu.dimension_semantics<arbitrary>], iteration_bounds = array<i64: 1, 1>, scalar_prefetch = 0 : i64, scratch_operands = 1 : i64, tpu.core_type = #tpu.core_type<tc>, window_params = [{transform_indices = @transform_0, window_bounds = array<i64: 8, 32>}, {transform_indices = @transform_1, window_bounds = array<i64: 1, 32>}, {transform_indices = @transform_2, window_bounds = array<i64: 1>}, {transform_indices = @transform_3, window_bounds = array<i64: 1, 8, 128>}]} {
    %c0_i32 = arith.constant 0 : i32
    %0 = arith.cmpi eq, %arg1, %c0_i32 : i32
    %1 = arith.extui %0 : i1 to i32
    %c0_i32_0 = arith.constant 0 : i32
    %2 = arith.cmpi ne, %1, %c0_i32_0 : i32
    scf.if %2 {
      %cst_10 = arith.constant 0.000000e+00 : f32
      %16 = vector.broadcast %cst_10 : f32 to vector<8x1xf32>
      %c0_11 = arith.constant 0 : index
      %c0_12 = arith.constant 0 : index
      %17 = vector.load %arg6[%c0_11, %c0_12] : memref<8x1xf32, #tpu.memory_space<vmem>>, vector<8x1xf32>
      tpu.vector_store %arg6[%c0_11, %c0_12], %16 {strides = array<i32>} : memref<8x1xf32, #tpu.memory_space<vmem>>, vector<8x1xf32>,
    } else {
    }
    %c0 = arith.constant 0 : index
    %c0_1 = arith.constant 0 : index
    %3 = vector.load %arg2[%c0, %c0_1] : memref<8x32xf32, #tpu.memory_space<vmem>>, vector<8x32xf32>
    %c0_2 = arith.constant 0 : index
    %c0_3 = arith.constant 0 : index
    %4 = vector.load %arg3[%c0_2, %c0_3] : memref<1x32xf32, #tpu.memory_space<vmem>>, vector<1x32xf32>
    %5 = vector.broadcast %4 : vector<1x32xf32> to vector<8x32xf32>
    %6 = arith.subf %5, %3 : vector<8x32xf32>
    %c0_4 = arith.constant 0 : index
    %c0_5 = arith.constant 0 : index
    %7 = vector.load %arg6[%c0_4, %c0_5] : memref<8x1xf32, #tpu.memory_space<vmem>>, vector<8x1xf32>
    %8 = arith.mulf %6, %6 : vector<8x32xf32>
    %cst = arith.constant dense<0.000000e+00> : vector<8xf32>
    %9 = vector.multi_reduction <add>, %8, %cst [1] : vector<8x32xf32> to vector<8xf32>
    %10 = vector.shape_cast %9 : vector<8xf32> to vector<8x1xf32>
    %11 = arith.addf %7, %10 : vector<8x1xf32>
    %c0_6 = arith.constant 0 : index
    %c0_7 = arith.constant 0 : index
    %12 = vector.load %arg6[%c0_6, %c0_7] : memref<8x1xf32, #tpu.memory_space<vmem>>, vector<8x1xf32>
    tpu.vector_store %arg6[%c0_6, %c0_7], %11 {strides = array<i32>} : memref<8x1xf32, #tpu.memory_space<vmem>>, vector<8x1xf32>,
    %c0_i32_8 = arith.constant 0 : i32
    %13 = arith.cmpi eq, %arg1, %c0_i32_8 : i32
    %14 = arith.extui %13 : i1 to i32
    %c0_i32_9 = arith.constant 0 : i32
    %15 = arith.cmpi ne, %14, %c0_i32_9 : i32
    scf.if %15 {
      %c0_10 = arith.constant 0 : index
      %c0_11 = arith.constant 0 : index
      %16 = vector.load %arg6[%c0_10, %c0_11] : memref<8x1xf32, #tpu.memory_space<vmem>>, vector<8x1xf32>
      %17 = vector.shape_cast %16 : vector<8x1xf32> to vector<1x8x1xf32>
      %cst_12 = arith.constant dense<0.000000e+00> : vector<1xf32>
      %18 = vector.multi_reduction <add>, %17, %cst_12 [1, 2] : vector<1x8x1xf32> to vector<1xf32>
      %19 = vector.shape_cast %18 : vector<1xf32> to vector<1x1x1xf32>
      %20 = vector.extract %19[0, 0, 0] : f32 from vector<1x1x1xf32>
      %21 = vector.broadcast %20 : f32 to vector<1x8x128xf32>
      %c0_13 = arith.constant 0 : index
      %c0_14 = arith.constant 0 : index
      %c0_15 = arith.constant 0 : index
      %22 = vector.load %arg5[%c0_13, %c0_14, %c0_15] : memref<1x8x128xf32, #tpu.memory_space<vmem>>, vector<1x8x128xf32>
      tpu.vector_store %arg5[%c0_13, %c0_14, %c0_15], %21 {strides = array<i32>} : memref<1x8x128xf32, #tpu.memory_space<vmem>>, vector<1x8x128xf32>,
    } else {
    }
    return
  }
  func.func @transform_0(%arg0: i32, %arg1: i32) -> (i32, i32) {
    %c0_i32 = arith.constant 0 : i32
    return %arg0, %arg1 : i32, i32
  }
  func.func @transform_1(%arg0: i32, %arg1: i32) -> (i32, i32) {
    %c0_i32 = arith.constant 0 : i32
    %c0_i32_0 = arith.constant 0 : i32
    return %c0_i32, %arg1 : i32, i32
  }
  func.func @transform_2(%arg0: i32, %arg1: i32) -> i32 {
    %c0_i32 = arith.constant 0 : i32
    %c0_i32_0 = arith.constant 0 : i32
    return %c0_i32 : i32
  }
  func.func @transform_3(%arg0: i32, %arg1: i32) -> (i32, i32, i32) {
    %c0_i32 = arith.constant 0 : i32
    %c0_i32_0 = arith.constant 0 : i32
    %c0_i32_1 = arith.constant 0 : i32
    return %arg0, %c0_i32, %c0_i32_0 : i32, i32, i32
  }
}

</mosaic_0001>

<llo_original>
// kernel: tpu_custom_call.1
$region0: #{tpu_custom_call.1}
  #allocation0 [shape = 'u32[]', space=smem, size = 0x4, offset = 0x4, fixed_abs, tag = 'smem constant byte address 0x4 - core index']
  #allocation1 [shape = 'u32[144,128]{1,0:T(1,128)}', space=vmem, size = 0x12000, scoped, tag = 'internal scratch']
  #allocation2 [shape = 'f32[8,1]{1,0:T(8,128)}', space=vmem, size = 0x1000, scoped, tag = 'scratch operand']
  #allocation3 [shape = 'f32[1]{0:T(128)S(6)}', space=smem, size = 0x200, scoped, tag = 'scoped memory for tpu_custom_call.1']
  %s0 = inlined_call_operand.hbm [shape: f32[8,32], index: 0, kind: input, shape index: {}]
  %s1 = inlined_call_operand.vmem [shape: f32[1,32], index: 1, kind: input, shape index: {}]
  %s2 = inlined_call_operand.<no memory space> [shape: f32[1], index: 2, kind: input, shape index: {}]
  %s3 = inlined_call_operand.hbm [shape: f32[1,8,128], index: 3, kind: output, shape index: {}]
  %s4 = sld [smem:[#allocation0]]
  $region34: #{tpu_custom_call.1} parent=0
    _
  %s6 = ssub.s32 1, %s4
  %s7 = scalar_select 0, %s6, %s4
  %8 = sst [smem:[#allocation3]] %s2
  $region1: #{tpu_custom_call.1} parent=0
    #allocation4 [shape = 'u8[4096]{0}', space=vmem, size = 0x1000, scoped, tag = 'input window, operand 0, single buffered']
    #allocation5 [shape = 's32[1]{0}', space=sflag, size = 0x4, scoped, tag = 'scoped memory for tpu_custom_call.1']
    #allocation6 [shape = 's32[1]{0}', space=sflag, size = 0x4, scoped, tag = 'scoped memory for tpu_custom_call.1']
    #allocation7 [shape = 'u8[4096]{0}', space=vmem, size = 0x1000, scoped, tag = 'output window, operand 0, single buffered']
    %9 = vsyncpa [#allocation5], 0
    %10 = vsyncpa [#allocation6], 0
    // Predicated region
    $region2: #{tpu_custom_call.1} parent=1 // pred_check
      _
    $region3: #{tpu_custom_call.1} parent=1 // pred_check_branch
      %12 = sbr.rel (0) target = $region5
    $region4: #{tpu_custom_call.1} parent=1 // pred_region
      %s14 = ssub.s32 128, 128
      %15 = vsyncadd [#allocation5], %s14
      %s17 = sshll.u32 [#allocation4], 4
      %s18 = int_to_ptr.vmem [resolvable:$true] %s17
      %20 = dma.hbm_to_vmem [thread:$0]  %s0, 128, %s18, [#allocation5]
    $region5: #{tpu_custom_call.1} parent=1 // pred_fallthru
      _
    // Predicated region
    $region6: #{tpu_custom_call.1} parent=1 // pred_check
      _
    $region7: #{tpu_custom_call.1} parent=1 // pred_check_branch
      %22 = sbr.rel (0) target = $region9
    $region8: #{tpu_custom_call.1} parent=1 // pred_region
      _
    $region9: #{tpu_custom_call.1} parent=1 // pred_fallthru
      _
    // Predicated region
    $region10: #{tpu_custom_call.1} parent=1 // pred_check
      _
    $region11: #{tpu_custom_call.1} parent=1 // pred_check_branch
      %24 = sbr.rel (0) target = $region13
    $region12: #{tpu_custom_call.1} parent=1 // pred_region
      _
    $region13: #{tpu_custom_call.1} parent=1 // pred_fallthru
      _
    // Predicated region
    $region14: #{tpu_custom_call.1} parent=1 // pred_check
      _
    $region15: #{tpu_custom_call.1} parent=1 // pred_check_branch
      %26 = sbr.rel (0) target = $region17
    $region16: #{tpu_custom_call.1} parent=1 // pred_region
      %27 = dma.done [#allocation5], 128
    $region17: #{tpu_custom_call.1} parent=1 // pred_fallthru
      _
    %p28 = scmp.eq.s32.totalorder 0, 0
    // Predicated region
    $region18: #{tpu_custom_call.1} parent=1 // pred_check
      %p29 = pneg %p28
    $region19: #{tpu_custom_call.1} parent=1 // pred_check_branch
      %31 = sbr.rel (%p29) target = $region21
    $region20: #{tpu_custom_call.1} parent=1 // pred_region
      %vm32 = vcmask 7168
      %33 = vst.msk [vmem:[#allocation2] sm:$0xff] %vm32, 0.0
    $region21: #{tpu_custom_call.1} parent=1 // pred_fallthru
      _
    %v34 = vld [vmem:[#allocation4] sm:$0xff]
    %v35 = vld [vmem:[%s1] sm:$0x1]
    %v37 = vlaneseq
    %v38 = vshrl.u32 %v37, 7
    %v39 = vsub.s32 0, %v38
    %v40 = vrot.slane %v35, %v39
    %v42 = vsub.f32 %v40, %v34
    %v43 = vld [vmem:[#allocation2] sm:$0xff]
    %v44 = vmul.f32 %v42, %v42
    %vm45 = vcmask 261120
    %v46 = vsel %vm45, %v44, 0.0
    %47 = vadd.xlane.f32.xlu0 %v46
    %v48 = vpop.xlane.xlu0 %47
    %v49 = vadd.f32 %v43, %v48
    %vm50 = vcmask 7168
    %51 = vst.msk [vmem:[#allocation2] sm:$0xff] %vm50, %v49
    // Predicated region
    $region22: #{tpu_custom_call.1} parent=1 // pred_check
      %p52 = pneg %p28
    $region23: #{tpu_custom_call.1} parent=1 // pred_check_branch
      %54 = sbr.rel (%p52) target = $region25
    $region24: #{tpu_custom_call.1} parent=1 // pred_region
      %v55 = vld [vmem:[#allocation2] sm:$0xff]
      %v56 = vsel %vm50, %v55, 0.0
      %57 = vadd.xlane.f32.xlu0 %v56
      %v58 = vpop.xlane.xlu0 %57
      %v59 = vrot.slane %v58, 4
      %v60 = vadd.f32 %v58, %v59
      %v61 = vrot.slane %v60, 2
      %v62 = vadd.f32 %v60, %v61
      %v63 = vrot.slane %v62, 1
      %v64 = vadd.f32 %v62, %v63
      %s65 = vtos %v64
      %v66 = vstv %s65
      %67 = vst [vmem:[#allocation7] sm:$0xff] %v66
    $region25: #{tpu_custom_call.1} parent=1 // pred_fallthru
      _
    // Predicated region
    $region26: #{tpu_custom_call.1} parent=1 // pred_check
      _
    $region27: #{tpu_custom_call.1} parent=1 // pred_check_branch
      %69 = sbr.rel (0) target = $region29
    $region28: #{tpu_custom_call.1} parent=1 // pred_region
      %s71 = ssub.s32 128, 128
      %72 = vsyncadd [#allocation6], %s71
      %s74 = sshll.u32 [#allocation7], 4
      %s75 = int_to_ptr.vmem [resolvable:$true] %s74
      %77 = dma.vmem_to_hbm [thread:$0]  %s75, 128, %s3, [#allocation6]
    $region29: #{tpu_custom_call.1} parent=1 // pred_fallthru
      _
    // Predicated region
    $region30: #{tpu_custom_call.1} parent=1 // pred_check
      _
    $region31: #{tpu_custom_call.1} parent=1 // pred_check_branch
      %79 = sbr.rel (0) target = $region33
    $region32: #{tpu_custom_call.1} parent=1 // pred_region
      %80 = dma.done [#allocation6], 128
    $region33: #{tpu_custom_call.1} parent=1 // pred_fallthru
      _
    %81 = vsyncpa [#allocation5], 1
    %82 = vsyncpa [#allocation6], 1

</llo_original>
